<compile_context>
chip_gen: v7x
topology: tpu7x:2x2x1
jax: 0.10.0
libtpu: 0.0.40
codegen_flags: <defaults>
</compile_context>

<pallas_src>
import functools

import jax
import jax.numpy as jnp
from jax.experimental import pallas as pl
from jax.experimental.pallas import tpu as pltpu


# --------------------------------------------------------------------------------------
# Parameter folding (done once, outside any per-timestep loop / pallas_call)
# --------------------------------------------------------------------------------------
def fold_readout_params(weight_t, bias, tau_m, batch_size, w_dtype=jnp.float32):
    """Precompute folded, timestep-invariant, pre-broadcast parameters.

    weight_t : (D_in, D_out) float32  (transpose of PyTorch nn.Linear weight)
    bias     : (D_out,)      float32
    tau_m    : (D_out,)      float32
    returns  : w_scaled (D_in, D_out) [w_dtype],
               b_scaled (B, D_out)    float32   (pre-broadcast; carries (1-alpha)),
               alpha_b  (B, D_out)    float32   (pre-broadcast).
    """
    d_out = tau_m.shape[0]
    alpha = jnp.exp(-1.0 / tau_m).astype(jnp.float32)            # (D_out,)
    one_minus_alpha = 1.0 - alpha
    w_scaled = (weight_t * one_minus_alpha[None, :]).astype(w_dtype)
    b_scaled = jnp.broadcast_to((bias * one_minus_alpha)[None, :],
                                (batch_size, d_out)).astype(jnp.float32)
    alpha_b = jnp.broadcast_to(alpha[None, :], (batch_size, d_out)).astype(jnp.float32)
    return w_scaled, b_scaled, alpha_b


# --------------------------------------------------------------------------------------
# Single-step kernel (exact equivalent of ReadoutIntegrator.forward) -- parity path only.
# --------------------------------------------------------------------------------------
def _readout_step_kernel(x_ref, w_ref, b_ref, alpha_ref, mem_ref, out_ref):
    d = jnp.dot(x_ref[...].astype(w_ref.dtype), w_ref[...],
                preferred_element_type=jnp.float32)
    out_ref[...] = mem_ref[...] * alpha_ref[...] + (d + b_ref[...])


@jax.jit
def readout_integrator_step(x, w_scaled, b_scaled, alpha_b, mem):
    """One forward step: returns new membrane potential (B, D_out)."""
    B, D_in = x.shape
    D_out = w_scaled.shape[1]
    return pl.pallas_call(
        _readout_step_kernel,
        out_shape=jax.ShapeDtypeStruct((B, D_out), jnp.float32),
        in_specs=[
            pl.BlockSpec((B, D_in), lambda: (0, 0)),
            pl.BlockSpec((D_in, D_out), lambda: (0, 0)),
            pl.BlockSpec((B, D_out), lambda: (0, 0)),
            pl.BlockSpec((B, D_out), lambda: (0, 0)),
            pl.BlockSpec((B, D_out), lambda: (0, 0)),
        ],
        out_specs=pl.BlockSpec((B, D_out), lambda: (0, 0)),
        input_output_aliases={4: 0},   # membrane state updated in place
    )(x, w_scaled, b_scaled, alpha_b, mem)


# --------------------------------------------------------------------------------------
# Time-blocked sequence kernel: TT timesteps per grid step.
#   - one batched MXU matmul per block,
#   - bias added once per block (outside the recurrence),
#   - recurrence fully unrolled, state carried in vregs within a block,
#   - membrane carried across blocks in a tiny VMEM scratch,
#   - lane-dense (B, TT*D_out) output slab per block.
# --------------------------------------------------------------------------------------
def _make_seq_kernel(tt, batch, d_out):
    def kernel(x_ref, w_ref, b_ref, alpha_ref, mem0_ref, out_ref, mem_sc):
        @pl.when(pl.program_id(0) == 0)
        def _():
            mem_sc[...] = mem0_ref[...]          # set_neuron_state: initial membrane

        # ONE MXU matmul for the whole time block; bias (already scaled by (1-alpha) and
        # pre-broadcast to (TT*B, D_out) in the wrapper) is added once, off the serial chain.
        d = jnp.dot(x_ref[...].astype(w_ref.dtype), w_ref[...],
                    preferred_element_type=jnp.float32)
        d = d + b_ref[...]                       # (TT*B, D_out)

        alpha = alpha_ref[...]                   # (B, D_out), pre-broadcast in wrapper
        mem = mem_sc[...]                        # carry from previous time block
        for t in range(tt):                      # fully unrolled; recurrence stays in vregs
            mem = mem * alpha + d[t * batch:(t + 1) * batch, :]
            # Store into the lane-dense output slab at a static lane offset.
            out_ref[:, t * d_out:(t + 1) * d_out] = mem
        mem_sc[...] = mem                        # carry to next time block

    return kernel


@functools.partial(jax.jit, static_argnames=("tt",))
def readout_integrator_sequence(x_seq, w_scaled, b_scaled, alpha_b, mem0, *, tt=None):
    """Run T forward steps; x_seq is (T, B, D_in); returns (T, B, D_out) membrane trace."""
    T, B, D_in = x_seq.shape
    D_out = w_scaled.shape[1]
    if tt is None:
        tt = T                                   # toy sizes: whole sequence in one grid step
    assert T % tt == 0, "sequence length must be a multiple of the time-block size"
    nb = T // tt
    # When the block is smaller than the full array, the sublane dim must be 8-aligned.
    assert nb == 1 or (tt * B) % 8 == 0, "tt*B must be a multiple of 8 when T > tt"

    x_flat = x_seq.reshape(T * B, D_in)          # contiguous reshape: free in XLA
    # Pre-broadcast bias to the block's matmul output shape (done once, outside the kernel).
    b_blk = jnp.broadcast_to(b_scaled[None, :, :], (tt, B, D_out)).reshape(tt * B, D_out)

    kernel = _make_seq_kernel(tt, B, D_out)
    out_raw = pl.pallas_call(
        kernel,
        out_shape=jax.ShapeDtypeStruct((nb, B, tt * D_out), jnp.float32),
        grid_spec=pltpu.PrefetchScalarGridSpec(
            num_scalar_prefetch=0,
            grid=(nb,),
            in_specs=[
                pl.BlockSpec((tt * B, D_in), lambda i: (i, 0)),      # x time block
                pl.BlockSpec((D_in, D_out), lambda i: (0, 0)),       # W'   (resident)
                pl.BlockSpec((tt * B, D_out), lambda i: (0, 0)),     # b'   (resident)
                pl.BlockSpec((B, D_out), lambda i: (0, 0)),          # alpha (resident)
                pl.BlockSpec((B, D_out), lambda i: (0, 0)),          # mem0  (resident)
            ],
            # Lane-dense output slab per time block: (B, TT*D_out) with TT*D_out >= 128 lanes.
            out_specs=pl.BlockSpec((None, B, tt * D_out), lambda i: (i, 0, 0)),
            scratch_shapes=[pltpu.VMEM((B, D_out), jnp.float32)],    # membrane carry
        ),
        compiler_params=pltpu.CompilerParams(
            dimension_semantics=("arbitrary",),  # recurrent over time blocks: sequential
        ),
    )(x_flat, w_scaled, b_blk, alpha_b, mem0)

    # Undo the lane-dense layout in the wrapper (pure plumbing on a tiny array):
    # (nb, B, TT*D_out) -> (nb, B, TT, D_out) -> (nb, TT, B, D_out) -> (T, B, D_out)
    out = out_raw.reshape(nb, B, tt, D_out).transpose(0, 2, 1, 3).reshape(T, B, D_out)
    return out


if __name__ == "__main__":
    # Small shapes consistent with the module: batch=2, input_dim=64, output_dim=32, T=8.
    batch, input_dim, output_dim, T = 2, 64, 32, 8
    tau_m_init, tau_m_std = 20.0, 5.0

    key = jax.random.PRNGKey(0)
    k_x, k_w, k_b, k_tau = jax.random.split(key, 4)

    # Deterministic parameter init mirroring the PyTorch module's __init__:
    #   nn.Linear default: weight, bias ~ U(-1/sqrt(in), 1/sqrt(in))
    #   tau_m ~ Normal(tau_m, tau_m_inital_std)
    bound = 1.0 / jnp.sqrt(jnp.float32(input_dim))
    weight = jax.random.uniform(
        k_w, (output_dim, input_dim), jnp.float32, minval=-bound, maxval=bound
    )
    bias = jax.random.uniform(
        k_b, (output_dim,), jnp.float32, minval=-bound, maxval=bound
    )
    tau_m = tau_m_init + tau_m_std * jax.random.normal(k_tau, (output_dim,), jnp.float32)

    # Input spikes for T timesteps and initial membrane state (set_neuron_state -> zeros).
    x_seq = (jax.random.uniform(k_x, (T, batch, input_dim)) > 0.5).astype(jnp.float32)
    mem0 = jnp.zeros((batch, output_dim), jnp.float32)

    # Fold tau/alpha into the linear parameters once (constant across timesteps).
    # (Pass w_dtype=jnp.bfloat16 here for the native-MXU path on v6e/v7x; keep f32 for parity.)
    w_scaled, b_scaled, alpha_b = fold_readout_params(weight.T, bias, tau_m, batch)

    # Pure-JAX references (exact original formula, un-folded).
    alpha_ref = jnp.exp(-1.0 / tau_m)

    def ref_step_fn(m, xt):
        m = m * alpha_ref + (1.0 - alpha_ref) * (xt @ weight.T + bias)
        return m, m

    ref_step = ref_step_fn(mem0, x_seq[0])[0]
    _, ref_seq = jax.lax.scan(ref_step_fn, mem0, x_seq)

    # --- single step (module.forward parity) ---
    out_step = readout_integrator_step(x_seq[0], w_scaled, b_scaled, alpha_b, mem0)
    out_step = jax.block_until_ready(out_step)
    assert out_step.shape == (batch, output_dim)
    assert jnp.allclose(out_step, ref_step, atol=1e-5, rtol=1e-5)

    # --- full sequence: one pallas_call, one matmul per time block, unrolled recurrence ---
    out_seq = readout_integrator_sequence(x_seq, w_scaled, b_scaled, alpha_b, mem0)
    out_seq = jax.block_until_ready(out_seq)
    assert out_seq.shape == (T, batch, output_dim)
    assert jnp.allclose(out_seq, ref_seq, atol=1e-5, rtol=1e-5)

    print("KERNEL_OK")
</pallas_src>

<mosaic_0001>
module attributes {stable_mosaic.version = 11 : i64} {
  func.func @_readout_step_kernel(%arg0: memref<2x64xf32, #tpu.memory_space<vmem>>, %arg1: memref<64x32xf32, #tpu.memory_space<vmem>>, %arg2: memref<2x32xf32, #tpu.memory_space<vmem>>, %arg3: memref<2x32xf32, #tpu.memory_space<vmem>>, %arg4: memref<2x32xf32, #tpu.memory_space<vmem>>, %arg5: memref<2x32xf32, #tpu.memory_space<vmem>>) attributes {dimension_semantics = [], scalar_prefetch = 0 : i64, scratch_operands = 0 : i64, tpu.core_type = #tpu.core_type<tc>} {
    %c0 = arith.constant 0 : index
    %c0_0 = arith.constant 0 : index
    %0 = vector.load %arg0[%c0, %c0_0] : memref<2x64xf32, #tpu.memory_space<vmem>>, vector<2x64xf32>
    %c0_1 = arith.constant 0 : index
    %c0_2 = arith.constant 0 : index
    %1 = vector.load %arg1[%c0_1, %c0_2] : memref<64x32xf32, #tpu.memory_space<vmem>>, vector<64x32xf32>
    %cst = arith.constant dense<0.000000e+00> : vector<2x32xf32>
    %2 = tpu.matmul %0, %1, %cst {dimension_numbers = #tpu.dot_dimension_numbers<[1], [0], [0], [1], [0, 0, 1, 1], [], []>} : vector<2x64xf32>, vector<64x32xf32>, vector<2x32xf32> -> vector<2x32xf32>
    %c0_3 = arith.constant 0 : index
    %c0_4 = arith.constant 0 : index
    %3 = vector.load %arg4[%c0_3, %c0_4] : memref<2x32xf32, #tpu.memory_space<vmem>>, vector<2x32xf32>
    %c0_5 = arith.constant 0 : index
    %c0_6 = arith.constant 0 : index
    %4 = vector.load %arg3[%c0_5, %c0_6] : memref<2x32xf32, #tpu.memory_space<vmem>>, vector<2x32xf32>
    %5 = arith.mulf %3, %4 : vector<2x32xf32>
    %c0_7 = arith.constant 0 : index
    %c0_8 = arith.constant 0 : index
    %6 = vector.load %arg2[%c0_7, %c0_8] : memref<2x32xf32, #tpu.memory_space<vmem>>, vector<2x32xf32>
    %7 = arith.addf %2, %6 : vector<2x32xf32>
    %8 = arith.addf %5, %7 : vector<2x32xf32>
    %c0_9 = arith.constant 0 : index
    %c0_10 = arith.constant 0 : index
    %9 = vector.load %arg5[%c0_9, %c0_10] : memref<2x32xf32, #tpu.memory_space<vmem>>, vector<2x32xf32>
    tpu.vector_store %arg5[%c0_9, %c0_10], %8 {strides = array<i32>} : memref<2x32xf32, #tpu.memory_space<vmem>>, vector<2x32xf32>,
    return
  }
}

</mosaic_0001>

<llo_original>
// kernel: readout_integrator_step.1
$region0: #{readout_integrator_step.1}
  #allocation0 [shape = 'u32[]', space=smem, size = 0x4, offset = 0x4, fixed_abs, tag = 'smem constant byte address 0x4 - core index']
  #allocation1 [shape = 'u32[144,128]{1,0:T(1,128)}', space=vmem, size = 0x12000, scoped, tag = 'internal scratch']
  %s0 = inlined_call_operand.vmem [shape: f32[2,64], index: 0, kind: input, shape index: {}]
  %s1 = inlined_call_operand.vmem [shape: f32[64,32], index: 1, kind: input, shape index: {}]
  %s2 = inlined_call_operand.vmem [shape: f32[2,32], index: 2, kind: input, shape index: {}]
  %s3 = inlined_call_operand.vmem [shape: f32[2,32], index: 3, kind: input, shape index: {}]
  %s4 = inlined_call_operand.hbm [shape: f32[2,32], index: 4, kind: input, shape index: {}, may-alias: {4,5}]
  %s5 = inlined_call_operand.hbm [shape: f32[2,32], index: 5, kind: output, shape index: {}, may-alias: {4,5}]
  %s6 = sld [smem:[#allocation0]]
  $region34: #{readout_integrator_step.1} parent=0
    _
  %s8 = ssub.s32 1, %s6
  %s9 = scalar_select 0, %s8, %s6
  $region1: #{readout_integrator_step.1} parent=0
    #allocation2 [shape = 'u8[1024]{0}', space=vmem, size = 0x400, scoped, tag = 'input window, operand 4, single buffered']
    #allocation3 [shape = 's32[1]{0}', space=sflag, size = 0x4, scoped, tag = 'scoped memory for readout_integrator_step.1']
    #allocation4 [shape = 's32[1]{0}', space=sflag, size = 0x4, scoped, tag = 'scoped memory for readout_integrator_step.1']
    #allocation5 [shape = 'u8[1024]{0}', space=vmem, size = 0x400, scoped, tag = 'output window, operand 0, single buffered']
    %10 = vsyncpa [#allocation3], 0
    %11 = vsyncpa [#allocation4], 0
    // Predicated region
    $region2: #{readout_integrator_step.1} parent=1 // pred_check
      _
    $region3: #{readout_integrator_step.1} parent=1 // pred_check_branch
      %13 = sbr.rel (0) target = $region5
    $region4: #{readout_integrator_step.1} parent=1 // pred_region
      _
    $region5: #{readout_integrator_step.1} parent=1 // pred_fallthru
      _
    // Predicated region
    $region6: #{readout_integrator_step.1} parent=1 // pred_check
      _
    $region7: #{readout_integrator_step.1} parent=1 // pred_check_branch
      %15 = sbr.rel (0) target = $region9
    $region8: #{readout_integrator_step.1} parent=1 // pred_region
      _
    $region9: #{readout_integrator_step.1} parent=1 // pred_fallthru
      _
    // Predicated region
    $region10: #{readout_integrator_step.1} parent=1 // pred_check
      _
    $region11: #{readout_integrator_step.1} parent=1 // pred_check_branch
      %17 = sbr.rel (0) target = $region13
    $region12: #{readout_integrator_step.1} parent=1 // pred_region
      _
    $region13: #{readout_integrator_step.1} parent=1 // pred_fallthru
      _
    // Predicated region
    $region14: #{readout_integrator_step.1} parent=1 // pred_check
      _
    $region15: #{readout_integrator_step.1} parent=1 // pred_check_branch
      %19 = sbr.rel (0) target = $region17
    $region16: #{readout_integrator_step.1} parent=1 // pred_region
      _
    $region17: #{readout_integrator_step.1} parent=1 // pred_fallthru
      _
    // Predicated region
    $region18: #{readout_integrator_step.1} parent=1 // pred_check
      _
    $region19: #{readout_integrator_step.1} parent=1 // pred_check_branch
      %21 = sbr.rel (0) target = $region21
    $region20: #{readout_integrator_step.1} parent=1 // pred_region
      %s23 = ssub.s32 32, 32
      %24 = vsyncadd [#allocation3], %s23
      %s26 = sshll.u32 [#allocation2], 4
      %s27 = int_to_ptr.vmem [resolvable:$true] %s26
      %29 = dma.hbm_to_vmem [thread:$0]  %s4, 32, %s27, [#allocation3]
    $region21: #{readout_integrator_step.1} parent=1 // pred_fallthru
      _
    // Predicated region
    $region22: #{readout_integrator_step.1} parent=1 // pred_check
      _
    $region23: #{readout_integrator_step.1} parent=1 // pred_check_branch
      %31 = sbr.rel (0) target = $region25
    $region24: #{readout_integrator_step.1} parent=1 // pred_region
      %32 = dma.done [#allocation3], 32
    $region25: #{readout_integrator_step.1} parent=1 // pred_fallthru
      _
    %v33 = vld [vmem:[%s0] sm:$0x3]
    %v34 = vld [vmem:[%s1] sm:$0xff]
    %v35 = vld [vmem:[%s1 + $0x8] sm:$0xff]
    %v36 = vld [vmem:[%s1 + $0x10] sm:$0xff]
    %v37 = vld [vmem:[%s1 + $0x18] sm:$0xff]
    %v38 = vld [vmem:[%s1 + $0x20] sm:$0xff]
    %v39 = vld [vmem:[%s1 + $0x28] sm:$0xff]
    %v40 = vld [vmem:[%s1 + $0x30] sm:$0xff]
    %v41 = vld [vmem:[%s1 + $0x38] sm:$0xff]
    %v42 = vld [vmem:[#allocation2] sm:$0x3]
    %v43 = vld [vmem:[%s3] sm:$0x3]
    %v44 = vmul.f32 %v42, %v43
    %v45 = vld [vmem:[%s2] sm:$0x3]
    %vm46 = vcmask 523264
    %v48 = vsel %vm46, %v33, 0
    %50 = vmatprep.subr.mxu0 0.0
    %51 = vmatpush1.msra.mxu0 %v34
    %52 = vmatprep.subr.mxu0 0.0
    %53 = vmatpush1.msra.mxu0 %v35
    %54 = vmatprep.subr.mxu0 0.0
    %55 = vmatpush1.msra.mxu0 %v36
    %56 = vmatprep.subr.mxu0 0.0
    %57 = vmatpush1.msra.mxu0 %v37
    %58 = vmatprep.subr.mxu0 0.0
    %59 = vmatpush1.msra.mxu0 %v38
    %60 = vmatprep.subr.mxu0 0.0
    %61 = vmatpush1.msra.mxu0 %v39
    %62 = vmatprep.subr.mxu0 0.0
    %63 = vmatpush1.msra.mxu0 %v40
    %64 = vmatprep.subr.mxu0 0.0
    %65 = vmatpush1.msra.mxu0 %v41
    %66 = vmatprep.subr.mxu0 0.0
    %67 = vmatpush1.msra.mxu0 0.0
    %68 = vmatprep.subr.mxu0 0.0
    %69 = vmatpush1.msra.mxu0 0.0
    %70 = vmatprep.subr.mxu0 0.0
    %71 = vmatpush1.msra.mxu0 0.0
    %72 = vmatprep.subr.mxu0 0.0
    %73 = vmatpush1.msra.mxu0 0.0
    %74 = vmatprep.subr.mxu0 0.0
    %75 = vmatpush1.msra.mxu0 0.0
    %76 = vmatprep.subr.mxu0 0.0
    %77 = vmatpush1.msra.mxu0 0.0
    %78 = vmatprep.subr.mxu0 0.0
    %79 = vmatpush1.msra.mxu0 0.0
    %80 = vmatprep.subr.mxu0 0.0
    %81 = vmatpush1.msra.mxu0 0.0
    %82 = vmatprep.subr.mxu0 0.0
    %83 = vmatpush1.msra.mxu0 0.0
    %84 = vmatprep.subr.mxu0 0.0
    %85 = vmatpush1.msra.mxu0 0.0
    %86 = vmatprep.subr.mxu0 0.0
    %87 = vmatpush1.msra.mxu0 0.0
    %88 = vmatprep.subr.mxu0 0.0
    %89 = vmatpush1.msra.mxu0 0.0
    %90 = vmatprep.subr.mxu0 0.0
    %91 = vmatpush1.msra.mxu0 0.0
    %92 = vmatprep.subr.mxu0 0.0
    %93 = vmatpush1.msra.mxu0 0.0
    %94 = vmatprep.subr.mxu0 0.0
    %95 = vmatpush1.msra.mxu0 0.0
    %96 = vmatprep.subr.mxu0 0.0
    %97 = vmatpush1.msra.mxu0 0.0
    %98 = vmatprep.subr.mxu0 0.0
    %99 = vmatpush1.msra.mxu0 0.0
    %100 = vmatprep.subr.mxu0 0.0
    %101 = vmatpush1.msra.mxu0 0.0
    %102 = vmatprep.subr.mxu0 0.0
    %103 = vmatpush1.msra.mxu0 0.0
    %104 = vmatprep.subr.mxu0 0.0
    %105 = vmatpush1.msra.mxu0 0.0
    %106 = vmatprep.subr.mxu0 0.0
    %107 = vmatpush1.msra.mxu0 0.0
    %108 = vmatprep.subr.mxu0 0.0
    %109 = vmatpush1.msra.mxu0 0.0
    %110 = vmatprep.subr.mxu0 0.0
    %111 = vmatpush1.msra.mxu0 0.0
    %112 = vmatprep.subr.mxu0 0.0
    %113 = vmatpush1.msra.mxu0 0.0
    %114 = vmatprep.mubr.f32.mxu0 0.0
    %115 = vmatmul.mubr.f32.gmra.mrb[0].mxu0 %v48
    %v116 = vpop.f32.mrb[0].mxu0
    %v117 = vadd.f32 %v45, %v116
    %v118 = vpop.f32.mrb[0].mxu0
    %119 = vdwg.mxu0
    %v120 = vadd.f32 %v44, %v117
    %vm121 = vcmask 254976
    %122 = vst.msk [vmem:[#allocation5] sm:$0x3] %vm121, %v120
    // Predicated region
    $region26: #{readout_integrator_step.1} parent=1 // pred_check
      _
    $region27: #{readout_integrator_step.1} parent=1 // pred_check_branch
      %124 = sbr.rel (0) target = $region29
    $region28: #{readout_integrator_step.1} parent=1 // pred_region
      %s126 = ssub.s32 32, 32
      %127 = vsyncadd [#allocation4], %s126
      %s129 = sshll.u32 [#allocation5], 4
      %s130 = int_to_ptr.vmem [resolvable:$true] %s129
      %132 = dma.vmem_to_hbm [thread:$0]  %s130, 32, %s5, [#allocation4]
    $region29: #{readout_integrator_step.1} parent=1 // pred_fallthru
      _
    // Predicated region
    $region30: #{readout_integrator_step.1} parent=1 // pred_check
      _
    $region31: #{readout_integrator_step.1} parent=1 // pred_check_branch
      %134 = sbr.rel (0) target = $region33
    $region32: #{readout_integrator_step.1} parent=1 // pred_region
      %135 = dma.done [#allocation4], 32
    $region33: #{readout_integrator_step.1} parent=1 // pred_fallthru
      _
    %136 = vsyncpa [#allocation3], 1
    %137 = vsyncpa [#allocation4], 1

</llo_original>
